<compile_context>
chip_gen: v5e
topology: v5e:2x2
jax: 0.10.0
libtpu: 0.0.40
codegen_flags: <defaults>
</compile_context>

<pallas_src>
import functools

import jax
import jax.numpy as jnp
from jax.experimental import pallas as pl
from jax.experimental.pallas import tpu as pltpu

INPUT_DIM = 32      # stand-in for X_train.shape[1] (handcrafted-feature dim)
NUM_UNITS = 200
OUTPUT_DIM = 14
NUM_LAYERS = 4

HIDDEN_PAD = 256    # lane-aligned hidden width (200 -> 256)
OUT_PAD = 128       # lane-aligned output width (14 -> 128)


def _round_up(x, m):
    return (x + m - 1) // m * m


def _pad_to(a, shape):
    pads = [(0, s - d) for d, s in zip(a.shape, shape)]
    return jnp.pad(a, pads)


def _mlp_kernel(x_ref,
                w1_ref, b1_ref,
                w2_ref, b2_ref,
                w3_ref, b3_ref,
                w4_ref, b4_ref,
                o_ref):
    """Fused 4-layer MLP forward for one batch tile (all weights in VMEM).

    x / W are bf16 (MXU-native); accumulation, bias add and ReLU are f32.
    """
    h = jnp.dot(x_ref[...], w1_ref[...],
                preferred_element_type=jnp.float32) + b1_ref[...]
    h = jnp.maximum(h, 0.0).astype(jnp.bfloat16)
    h = jnp.dot(h, w2_ref[...],
                preferred_element_type=jnp.float32) + b2_ref[...]
    h = jnp.maximum(h, 0.0).astype(jnp.bfloat16)
    h = jnp.dot(h, w3_ref[...],
                preferred_element_type=jnp.float32) + b3_ref[...]
    h = jnp.maximum(h, 0.0).astype(jnp.bfloat16)
    o_ref[...] = jnp.dot(h, w4_ref[...],
                         preferred_element_type=jnp.float32) + b4_ref[...]


@functools.partial(jax.jit, static_argnames=("batch_tile",))
def network_forward(x, params, *, batch_tile=256):
    """x: (B, INPUT_DIM) float32 -> logits (B, OUTPUT_DIM) float32."""
    (w1, b1), (w2, b2), (w3, b3), (w4, b4) = params
    B, F = x.shape
    assert F == INPUT_DIM

    # ---- batch tiling: shrink tile for small B, pad B to a tile multiple ----
    tile = min(batch_tile, _round_up(B, 16))
    tile = _round_up(tile, 16)              # multiple of 16 (bf16 sublanes)
    Bp = _round_up(B, tile)
    grid = (Bp // tile,)

    # ---- lane-aligned, zero-padded weights (bf16) and biases (f32) ----
    w1p = _pad_to(w1, (INPUT_DIM, HIDDEN_PAD)).astype(jnp.bfloat16)
    w2p = _pad_to(w2, (HIDDEN_PAD, HIDDEN_PAD)).astype(jnp.bfloat16)
    w3p = _pad_to(w3, (HIDDEN_PAD, HIDDEN_PAD)).astype(jnp.bfloat16)
    w4p = _pad_to(w4, (HIDDEN_PAD, OUT_PAD)).astype(jnp.bfloat16)
    b1p = _pad_to(b1, (1, HIDDEN_PAD)).astype(jnp.float32)
    b2p = _pad_to(b2, (1, HIDDEN_PAD)).astype(jnp.float32)
    b3p = _pad_to(b3, (1, HIDDEN_PAD)).astype(jnp.float32)
    b4p = _pad_to(b4, (1, OUT_PAD)).astype(jnp.float32)

    xp = _pad_to(x, (Bp, INPUT_DIM)).astype(jnp.bfloat16)

    # ---- cost estimate (advisory for XLA scheduling) ----
    flops = 2 * Bp * (INPUT_DIM * HIDDEN_PAD
                      + 2 * HIDDEN_PAD * HIDDEN_PAD
                      + HIDDEN_PAD * OUT_PAD)
    weight_bytes = 2 * (INPUT_DIM * HIDDEN_PAD
                        + 2 * HIDDEN_PAD * HIDDEN_PAD
                        + HIDDEN_PAD * OUT_PAD) + 4 * (3 * HIDDEN_PAD + OUT_PAD)
    bytes_accessed = Bp * INPUT_DIM * 2 + weight_bytes + Bp * OUT_PAD * 4
    cost = pl.CostEstimate(flops=flops, transcendentals=0,
                           bytes_accessed=bytes_accessed)

    # Weights/biases: full-array blocks with constant index_map (VMEM-resident).
    def wspec(shape):
        return pl.BlockSpec(shape, lambda i: (0,) * len(shape))

    out_p = pl.pallas_call(
        _mlp_kernel,
        out_shape=jax.ShapeDtypeStruct((Bp, OUT_PAD), jnp.float32),
        grid=grid,
        in_specs=[
            pl.BlockSpec((tile, INPUT_DIM), lambda i: (i, 0)),   # x tile
            wspec((INPUT_DIM, HIDDEN_PAD)), wspec((1, HIDDEN_PAD)),
            wspec((HIDDEN_PAD, HIDDEN_PAD)), wspec((1, HIDDEN_PAD)),
            wspec((HIDDEN_PAD, HIDDEN_PAD)), wspec((1, HIDDEN_PAD)),
            wspec((HIDDEN_PAD, OUT_PAD)), wspec((1, OUT_PAD)),
        ],
        out_specs=pl.BlockSpec((tile, OUT_PAD), lambda i: (i, 0)),
        compiler_params=pltpu.CompilerParams(
            dimension_semantics=("parallel",)),
        cost_estimate=cost,
    )(xp, w1p, b1p, w2p, b2p, w3p, b3p, w4p, b4p)

    # Strip batch padding and the lane-padded logit columns.
    return out_p[:B, :OUTPUT_DIM]


def init_params(key):
    """Deterministic init mimicking torch.nn.Linear default
    (U[-1/sqrt(fan_in), 1/sqrt(fan_in)]).

    Weights stored transposed relative to PyTorch: shape (in, out).
    Biases stored as (1, out).
    """
    dims = [INPUT_DIM] + [NUM_UNITS] * (NUM_LAYERS - 1) + [OUTPUT_DIM]
    params = []
    for li in range(NUM_LAYERS):
        fan_in, fan_out = dims[li], dims[li + 1]
        key, kw, kb = jax.random.split(key, 3)
        bound = 1.0 / jnp.sqrt(jnp.float32(fan_in))
        w = jax.random.uniform(kw, (fan_in, fan_out), jnp.float32,
                               minval=-bound, maxval=bound)
        b = jax.random.uniform(kb, (1, fan_out), jnp.float32,
                               minval=-bound, maxval=bound)
        params.append((w, b))
    return tuple(params)


def _reference_forward(x, params):
    """Plain-JAX f32 reference for correctness check."""
    h = x
    for li, (w, b) in enumerate(params):
        h = h @ w + b
        if li < len(params) - 1:
            h = jnp.maximum(h, 0.0)
    return h


if __name__ == "__main__":
    key = jax.random.PRNGKey(0)
    kx, kp = jax.random.split(key)
    params = init_params(kp)

    # Small batch (exercises tile shrinking to 16 and batch padding).
    B = 8
    x = jax.random.normal(kx, (B, INPUT_DIM), jnp.float32)
    out = jax.block_until_ready(network_forward(x, params))
    ref = _reference_forward(x, params)
    assert out.shape == (B, OUTPUT_DIM)
    # bf16 matmul inputs -> looser tolerance than the f32 reference.
    assert jnp.allclose(out, ref, atol=5e-2, rtol=5e-2), "mismatch vs reference"

    # Non-tile-multiple batch (exercises the padding path).
    B2 = 33
    x2 = jax.random.normal(kx, (B2, INPUT_DIM), jnp.float32)
    out2 = jax.block_until_ready(network_forward(x2, params))
    ref2 = _reference_forward(x2, params)
    assert out2.shape == (B2, OUTPUT_DIM)
    assert jnp.allclose(out2, ref2, atol=5e-2, rtol=5e-2), "mismatch vs reference"

    print("KERNEL_OK")
</pallas_src>

<mosaic_0001>
module attributes {stable_mosaic.version = 11 : i64} {
  func.func @_mlp_kernel(%arg0: i32, %arg1: memref<16x32xbf16, #tpu.memory_space<vmem>>, %arg2: memref<32x256xbf16, #tpu.memory_space<vmem>>, %arg3: memref<1x256xf32, #tpu.memory_space<vmem>>, %arg4: memref<256x256xbf16, #tpu.memory_space<vmem>>, %arg5: memref<1x256xf32, #tpu.memory_space<vmem>>, %arg6: memref<256x256xbf16, #tpu.memory_space<vmem>>, %arg7: memref<1x256xf32, #tpu.memory_space<vmem>>, %arg8: memref<256x128xbf16, #tpu.memory_space<vmem>>, %arg9: memref<1x128xf32, #tpu.memory_space<vmem>>, %arg10: memref<16x128xf32, #tpu.memory_space<vmem>>) attributes {dimension_semantics = [#tpu.dimension_semantics<parallel>], iteration_bounds = array<i64: 1>, scalar_prefetch = 0 : i64, scratch_operands = 0 : i64, tpu.core_type = #tpu.core_type<tc>, window_params = [{transform_indices = @transform_0, window_bounds = array<i64: 16, 32>}, {pipeline_mode = #tpu.pipeline_mode<synchronous>, transform_indices = @transform_1, window_bounds = array<i64: 32, 256>}, {pipeline_mode = #tpu.pipeline_mode<synchronous>, transform_indices = @transform_2, window_bounds = array<i64: 1, 256>}, {pipeline_mode = #tpu.pipeline_mode<synchronous>, transform_indices = @transform_3, window_bounds = array<i64: 256, 256>}, {pipeline_mode = #tpu.pipeline_mode<synchronous>, transform_indices = @transform_4, window_bounds = array<i64: 1, 256>}, {pipeline_mode = #tpu.pipeline_mode<synchronous>, transform_indices = @transform_5, window_bounds = array<i64: 256, 256>}, {pipeline_mode = #tpu.pipeline_mode<synchronous>, transform_indices = @transform_6, window_bounds = array<i64: 1, 256>}, {pipeline_mode = #tpu.pipeline_mode<synchronous>, transform_indices = @transform_7, window_bounds = array<i64: 256, 128>}, {pipeline_mode = #tpu.pipeline_mode<synchronous>, transform_indices = @transform_8, window_bounds = array<i64: 1, 128>}, {transform_indices = @transform_9, window_bounds = array<i64: 16, 128>}]} {
    %c0 = arith.constant 0 : index
    %c0_0 = arith.constant 0 : index
    %0 = vector.load %arg1[%c0, %c0_0] : memref<16x32xbf16, #tpu.memory_space<vmem>>, vector<16x32xbf16>
    %c0_1 = arith.constant 0 : index
    %c0_2 = arith.constant 0 : index
    %1 = vector.load %arg2[%c0_1, %c0_2] : memref<32x256xbf16, #tpu.memory_space<vmem>>, vector<32x256xbf16>
    %cst = arith.constant dense<0.000000e+00> : vector<16x256xf32>
    %2 = tpu.matmul %0, %1, %cst {dimension_numbers = #tpu.dot_dimension_numbers<[1], [0], [0], [1], [0, 0, 1, 1], [], []>} : vector<16x32xbf16>, vector<32x256xbf16>, vector<16x256xf32> -> vector<16x256xf32>
    %c0_3 = arith.constant 0 : index
    %c0_4 = arith.constant 0 : index
    %3 = vector.load %arg3[%c0_3, %c0_4] : memref<1x256xf32, #tpu.memory_space<vmem>>, vector<1x256xf32>
    %4 = vector.broadcast %3 : vector<1x256xf32> to vector<16x256xf32>
    %5 = arith.addf %2, %4 : vector<16x256xf32>
    %cst_5 = arith.constant 0.000000e+00 : f32
    %6 = vector.broadcast %cst_5 : f32 to vector<16x256xf32>
    %7 = arith.maximumf %5, %6 : vector<16x256xf32>
    %8 = arith.truncf %7 : vector<16x256xf32> to vector<16x256xbf16>
    %c0_6 = arith.constant 0 : index
    %c0_7 = arith.constant 0 : index
    %9 = vector.load %arg4[%c0_6, %c0_7] : memref<256x256xbf16, #tpu.memory_space<vmem>>, vector<256x256xbf16>
    %cst_8 = arith.constant dense<0.000000e+00> : vector<16x256xf32>
    %10 = tpu.matmul %8, %9, %cst_8 {dimension_numbers = #tpu.dot_dimension_numbers<[1], [0], [0], [1], [0, 0, 1, 1], [], []>} : vector<16x256xbf16>, vector<256x256xbf16>, vector<16x256xf32> -> vector<16x256xf32>
    %c0_9 = arith.constant 0 : index
    %c0_10 = arith.constant 0 : index
    %11 = vector.load %arg5[%c0_9, %c0_10] : memref<1x256xf32, #tpu.memory_space<vmem>>, vector<1x256xf32>
    %12 = vector.broadcast %11 : vector<1x256xf32> to vector<16x256xf32>
    %13 = arith.addf %10, %12 : vector<16x256xf32>
    %cst_11 = arith.constant 0.000000e+00 : f32
    %14 = vector.broadcast %cst_11 : f32 to vector<16x256xf32>
    %15 = arith.maximumf %13, %14 : vector<16x256xf32>
    %16 = arith.truncf %15 : vector<16x256xf32> to vector<16x256xbf16>
    %c0_12 = arith.constant 0 : index
    %c0_13 = arith.constant 0 : index
    %17 = vector.load %arg6[%c0_12, %c0_13] : memref<256x256xbf16, #tpu.memory_space<vmem>>, vector<256x256xbf16>
    %cst_14 = arith.constant dense<0.000000e+00> : vector<16x256xf32>
    %18 = tpu.matmul %16, %17, %cst_14 {dimension_numbers = #tpu.dot_dimension_numbers<[1], [0], [0], [1], [0, 0, 1, 1], [], []>} : vector<16x256xbf16>, vector<256x256xbf16>, vector<16x256xf32> -> vector<16x256xf32>
    %c0_15 = arith.constant 0 : index
    %c0_16 = arith.constant 0 : index
    %19 = vector.load %arg7[%c0_15, %c0_16] : memref<1x256xf32, #tpu.memory_space<vmem>>, vector<1x256xf32>
    %20 = vector.broadcast %19 : vector<1x256xf32> to vector<16x256xf32>
    %21 = arith.addf %18, %20 : vector<16x256xf32>
    %cst_17 = arith.constant 0.000000e+00 : f32
    %22 = vector.broadcast %cst_17 : f32 to vector<16x256xf32>
    %23 = arith.maximumf %21, %22 : vector<16x256xf32>
    %24 = arith.truncf %23 : vector<16x256xf32> to vector<16x256xbf16>
    %c0_18 = arith.constant 0 : index
    %c0_19 = arith.constant 0 : index
    %25 = vector.load %arg8[%c0_18, %c0_19] : memref<256x128xbf16, #tpu.memory_space<vmem>>, vector<256x128xbf16>
    %cst_20 = arith.constant dense<0.000000e+00> : vector<16x128xf32>
    %26 = tpu.matmul %24, %25, %cst_20 {dimension_numbers = #tpu.dot_dimension_numbers<[1], [0], [0], [1], [0, 0, 1, 1], [], []>} : vector<16x256xbf16>, vector<256x128xbf16>, vector<16x128xf32> -> vector<16x128xf32>
    %c0_21 = arith.constant 0 : index
    %c0_22 = arith.constant 0 : index
    %27 = vector.load %arg9[%c0_21, %c0_22] : memref<1x128xf32, #tpu.memory_space<vmem>>, vector<1x128xf32>
    %28 = vector.broadcast %27 : vector<1x128xf32> to vector<16x128xf32>
    %29 = arith.addf %26, %28 : vector<16x128xf32>
    %c0_23 = arith.constant 0 : index
    %c0_24 = arith.constant 0 : index
    %30 = vector.load %arg10[%c0_23, %c0_24] : memref<16x128xf32, #tpu.memory_space<vmem>>, vector<16x128xf32>
    tpu.vector_store %arg10[%c0_23, %c0_24], %29 {strides = array<i32>} : memref<16x128xf32, #tpu.memory_space<vmem>>, vector<16x128xf32>,
    return
  }
  func.func @transform_0(%arg0: i32) -> (i32, i32) {
    %c0_i32 = arith.constant 0 : i32
    %c0_i32_0 = arith.constant 0 : i32
    return %arg0, %c0_i32 : i32, i32
  }
  func.func @transform_1(%arg0: i32) -> (i32, i32) {
    %c0_i32 = arith.constant 0 : i32
    %c0_i32_0 = arith.constant 0 : i32
    %c0_i32_1 = arith.constant 0 : i32
    return %c0_i32, %c0_i32_0 : i32, i32
  }
  func.func @transform_2(%arg0: i32) -> (i32, i32) {
    %c0_i32 = arith.constant 0 : i32
    %c0_i32_0 = arith.constant 0 : i32
    %c0_i32_1 = arith.constant 0 : i32
    return %c0_i32, %c0_i32_0 : i32, i32
  }
  func.func @transform_3(%arg0: i32) -> (i32, i32) {
    %c0_i32 = arith.constant 0 : i32
    %c0_i32_0 = arith.constant 0 : i32
    %c0_i32_1 = arith.constant 0 : i32
    return %c0_i32, %c0_i32_0 : i32, i32
  }
  func.func @transform_4(%arg0: i32) -> (i32, i32) {
    %c0_i32 = arith.constant 0 : i32
    %c0_i32_0 = arith.constant 0 : i32
    %c0_i32_1 = arith.constant 0 : i32
    return %c0_i32, %c0_i32_0 : i32, i32
  }
  func.func @transform_5(%arg0: i32) -> (i32, i32) {
    %c0_i32 = arith.constant 0 : i32
    %c0_i32_0 = arith.constant 0 : i32
    %c0_i32_1 = arith.constant 0 : i32
    return %c0_i32, %c0_i32_0 : i32, i32
  }
  func.func @transform_6(%arg0: i32) -> (i32, i32) {
    %c0_i32 = arith.constant 0 : i32
    %c0_i32_0 = arith.constant 0 : i32
    %c0_i32_1 = arith.constant 0 : i32
    return %c0_i32, %c0_i32_0 : i32, i32
  }
  func.func @transform_7(%arg0: i32) -> (i32, i32) {
    %c0_i32 = arith.constant 0 : i32
    %c0_i32_0 = arith.constant 0 : i32
    %c0_i32_1 = arith.constant 0 : i32
    return %c0_i32, %c0_i32_0 : i32, i32
  }
  func.func @transform_8(%arg0: i32) -> (i32, i32) {
    %c0_i32 = arith.constant 0 : i32
    %c0_i32_0 = arith.constant 0 : i32
    %c0_i32_1 = arith.constant 0 : i32
    return %c0_i32, %c0_i32_0 : i32, i32
  }
  func.func @transform_9(%arg0: i32) -> (i32, i32) {
    %c0_i32 = arith.constant 0 : i32
    %c0_i32_0 = arith.constant 0 : i32
    return %arg0, %c0_i32 : i32, i32
  }
}

</mosaic_0001>

<llo_original>
// kernel: network_forward.1
$region0: #{network_forward.1}
  #allocation0 [shape = 'u32[]', space=smem, size = 0x4, offset = 0x4, fixed_abs, tag = 'smem constant byte address 0x4 - core index']
  #allocation1 [shape = 'u32[72,128]{1,0:T(1,128)}', space=vmem, size = 0x9000, scoped, tag = 'internal scratch']
  %s0 = inlined_call_operand.vmem [shape: bf16[16,32], index: 0, kind: input, shape index: {}]
  %s1 = inlined_call_operand.vmem [shape: bf16[32,256], index: 1, kind: input, shape index: {}]
  %s2 = inlined_call_operand.vmem [shape: f32[1,256], index: 2, kind: input, shape index: {}]
  %s3 = inlined_call_operand.vmem [shape: bf16[256,256], index: 3, kind: input, shape index: {}]
  %s4 = inlined_call_operand.vmem [shape: f32[1,256], index: 4, kind: input, shape index: {}]
  %s5 = inlined_call_operand.vmem [shape: bf16[256,256], index: 5, kind: input, shape index: {}]
  %s6 = inlined_call_operand.vmem [shape: f32[1,256], index: 6, kind: input, shape index: {}]
  %s7 = inlined_call_operand.vmem [shape: bf16[256,128], index: 7, kind: input, shape index: {}]
  %s8 = inlined_call_operand.vmem [shape: f32[1,128], index: 8, kind: input, shape index: {}]
  %s9 = inlined_call_operand.vmem [shape: f32[16,128], index: 9, kind: output, shape index: {}]
  %s10 = sld [smem:[#allocation0]]
  $region46: #{network_forward.1} parent=0
    _
  %s12 = ssub.s32 1, %s10
  %s13 = scalar_select 0, %s12, %s10
  // Predicated region
  $region2: #{network_forward.1} parent=0 // pred_check
    _
  $region3: #{network_forward.1} parent=0 // pred_check_branch
    %15 = sbr.rel (0) target = $region5
  $region4: #{network_forward.1} parent=0 // pred_region
    _
  $region5: #{network_forward.1} parent=0 // pred_fallthru
    _
  // Predicated region
  $region6: #{network_forward.1} parent=0 // pred_check
    _
  $region7: #{network_forward.1} parent=0 // pred_check_branch
    %17 = sbr.rel (0) target = $region9
  $region8: #{network_forward.1} parent=0 // pred_region
    _
  $region9: #{network_forward.1} parent=0 // pred_fallthru
    _
  // Predicated region
  $region10: #{network_forward.1} parent=0 // pred_check
    _
  $region11: #{network_forward.1} parent=0 // pred_check_branch
    %19 = sbr.rel (0) target = $region13
  $region12: #{network_forward.1} parent=0 // pred_region
    _
  $region13: #{network_forward.1} parent=0 // pred_fallthru
    _
  // Predicated region
  $region14: #{network_forward.1} parent=0 // pred_check
    _
  $region15: #{network_forward.1} parent=0 // pred_check_branch
    %21 = sbr.rel (0) target = $region17
  $region16: #{network_forward.1} parent=0 // pred_region
    _
  $region17: #{network_forward.1} parent=0 // pred_fallthru
    _
  // Predicated region
  $region18: #{network_forward.1} parent=0 // pred_check
    _
  $region19: #{network_forward.1} parent=0 // pred_check_branch
    %23 = sbr.rel (0) target = $region21
  $region20: #{network_forward.1} parent=0 // pred_region
    _
  $region21: #{network_forward.1} parent=0 // pred_fallthru
    _
  // Predicated region
  $region22: #{network_forward.1} parent=0 // pred_check
    _
  $region23: #{network_forward.1} parent=0 // pred_check_branch
    %25 = sbr.rel (0) target = $region25
  $region24: #{network_forward.1} parent=0 // pred_region
    _
  $region25: #{network_forward.1} parent=0 // pred_fallthru
    _
  // Predicated region
  $region26: #{network_forward.1} parent=0 // pred_check
    _
  $region27: #{network_forward.1} parent=0 // pred_check_branch
    %27 = sbr.rel (0) target = $region29
  $region28: #{network_forward.1} parent=0 // pred_region
    _
  $region29: #{network_forward.1} parent=0 // pred_fallthru
    _
  // Predicated region
  $region30: #{network_forward.1} parent=0 // pred_check
    _
  $region31: #{network_forward.1} parent=0 // pred_check_branch
    %29 = sbr.rel (0) target = $region33
  $region32: #{network_forward.1} parent=0 // pred_region
    _
  $region33: #{network_forward.1} parent=0 // pred_fallthru
    _
  // Predicated region
  $region34: #{network_forward.1} parent=0 // pred_check
    _
  $region35: #{network_forward.1} parent=0 // pred_check_branch
    %31 = sbr.rel (0) target = $region37
  $region36: #{network_forward.1} parent=0 // pred_region
    _
  $region37: #{network_forward.1} parent=0 // pred_fallthru
    _
  %v33 = vld [vmem:[%s0] sm:$0xf]
  %v34 = vld [vmem:[%s0 + $0x4] sm:$0xf]
  %v35 = vld [vmem:[%s1] sm:$0xff]
  %v36 = vld [vmem:[%s1 + $0x8] sm:$0xff]
  %v37 = vld [vmem:[%s1 + $0x10] sm:$0xff]
  %v38 = vld [vmem:[%s1 + $0x18] sm:$0xff]
  %v39 = vld [vmem:[%s2] sm:$0x3]
  %v41 = vperm.slane %v39, 0
  %v42 = vperm.slane %v39, 1
  %v47 = vunpack.c.l.b16 %v33
  %v48 = vunpack.c.l.b16 %v34
  %v49 = vpack.c.b16 %v48, %v47
  %v54 = vunpack.c.l.b16 %v35
  %v55 = vunpack.c.h.b16 %v35
  %v56 = vunpack.c.l.b16 %v36
  %v57 = vunpack.c.h.b16 %v36
  %v58 = vunpack.c.l.b16 %v37
  %v59 = vunpack.c.h.b16 %v37
  %v60 = vunpack.c.l.b16 %v38
  %v61 = vunpack.c.h.b16 %v38
  %v62 = vpack.c.b16 %v56, %v54
  %v63 = vpack.c.b16 %v57, %v55
  %v64 = vpack.c.b16 %v60, %v58
  %v65 = vpack.c.b16 %v61, %v59
  %vm70 = vcmask 261120
  %v72 = vsel %vm70, %v49, 0
  %74 = vmatpush.bf16.msra.mxu0 0
  %75 = vmatpush.bf16.msra.mxu0 0
  %76 = vmatpush.bf16.msra.mxu0 0
  %77 = vmatpush.bf16.msra.mxu0 0
  %78 = vmatpush.bf16.msra.mxu0 0
  %79 = vmatpush.bf16.msra.mxu0 0
  %80 = vmatpush.bf16.msra.mxu0 %v64
  %81 = vmatpush.bf16.msra.mxu0 %v62
  %82 = vmatmul.bf16.gmra.mxu0 %v72
  %v83 = vpop.f32.mrf.mxu0
  %v84 = vadd.f32 %v41, %v83
  %v85 = vpop.f32.mrf.mxu0
  %v86 = vadd.f32 %v41, %v85
  %87 = vdwg.mxu0
  %88 = vmatpush.bf16.msra.mxu0 0
  %89 = vmatpush.bf16.msra.mxu0 0
  %90 = vmatpush.bf16.msra.mxu0 0
  %91 = vmatpush.bf16.msra.mxu0 0
  %92 = vmatpush.bf16.msra.mxu0 0
  %93 = vmatpush.bf16.msra.mxu0 0
  %94 = vmatpush.bf16.msra.mxu0 %v65
  %95 = vmatpush.bf16.msra.mxu0 %v63
  %96 = vmatmul.bf16.gmra.mxu0 %v72
  %v97 = vpop.f32.mrf.mxu0
  %v98 = vadd.f32 %v42, %v97
  %v99 = vpop.f32.mrf.mxu0
  %v100 = vadd.f32 %v42, %v99
  %101 = vdwg.mxu0
  %v102 = vmax.f32 %v84, 0.0
  %v103 = vmax.f32 %v98, 0.0
  %v104 = vmax.f32 %v86, 0.0
  %v105 = vmax.f32 %v100, 0.0
  %v106 = vpack.c.bf16 %v104, %v102
  %v107 = vpack.c.bf16 %v105, %v103
  %v108 = vld [vmem:[%s3] sm:$0xff]
  %v109 = vld [vmem:[%s3 + $0x8] sm:$0xff]
  %v110 = vld [vmem:[%s3 + $0x10] sm:$0xff]
  %v111 = vld [vmem:[%s3 + $0x18] sm:$0xff]
  %v112 = vld [vmem:[%s3 + $0x20] sm:$0xff]
  %v113 = vld [vmem:[%s3 + $0x28] sm:$0xff]
  %v114 = vld [vmem:[%s3 + $0x30] sm:$0xff]
  %v115 = vld [vmem:[%s3 + $0x38] sm:$0xff]
  %v116 = vld [vmem:[%s3 + $0x40] sm:$0xff]
  %v117 = vld [vmem:[%s3 + $0x48] sm:$0xff]
  %v118 = vld [vmem:[%s3 + $0x50] sm:$0xff]
  %v119 = vld [vmem:[%s3 + $0x58] sm:$0xff]
  %v120 = vld [vmem:[%s3 + $0x60] sm:$0xff]
  %v121 = vld [vmem:[%s3 + $0x68] sm:$0xff]
  %v122 = vld [vmem:[%s3 + $0x70] sm:$0xff]
  %v123 = vld [vmem:[%s3 + $0x78] sm:$0xff]
  %v124 = vld [vmem:[%s3 + $0x80] sm:$0xff]
  %v125 = vld [vmem:[%s3 + $0x88] sm:$0xff]
  %v126 = vld [vmem:[%s3 + $0x90] sm:$0xff]
  %v127 = vld [vmem:[%s3 + $0x98] sm:$0xff]
  %v128 = vld [vmem:[%s3 + $0xa0] sm:$0xff]
  %v129 = vld [vmem:[%s3 + $0xa8] sm:$0xff]
  %v130 = vld [vmem:[%s3 + $0xb0] sm:$0xff]
  %v131 = vld [vmem:[%s3 + $0xb8] sm:$0xff]
  %v132 = vld [vmem:[%s3 + $0xc0] sm:$0xff]
  %v133 = vld [vmem:[%s3 + $0xc8] sm:$0xff]
  %v134 = vld [vmem:[%s3 + $0xd0] sm:$0xff]
  %v135 = vld [vmem:[%s3 + $0xd8] sm:$0xff]
  %v136 = vld [vmem:[%s3 + $0xe0] sm:$0xff]
  %v137 = vld [vmem:[%s3 + $0xe8] sm:$0xff]
  %v138 = vld [vmem:[%s3 + $0xf0] sm:$0xff]
  %v139 = vld [vmem:[%s3 + $0xf8] sm:$0xff]
  %v140 = vld [vmem:[%s4] sm:$0x3]
  %v142 = vperm.slane %v140, 0
  %v143 = vperm.slane %v140, 1
  %v178 = vunpack.c.l.b16 %v108
  %v179 = vunpack.c.h.b16 %v108
  %v180 = vunpack.c.l.b16 %v109
  %v181 = vunpack.c.h.b16 %v109
  %v182 = vunpack.c.l.b16 %v110
  %v183 = vunpack.c.h.b16 %v110
  %v184 = vunpack.c.l.b16 %v111
  %v185 = vunpack.c.h.b16 %v111
  %v186 = vunpack.c.l.b16 %v112
  %v187 = vunpack.c.h.b16 %v112
  %v188 = vunpack.c.l.b16 %v113
  %v189 = vunpack.c.h.b16 %v113
  %v190 = vunpack.c.l.b16 %v114
  %v191 = vunpack.c.h.b16 %v114
  %v192 = vunpack.c.l.b16 %v115
  %v193 = vunpack.c.h.b16 %v115
  %v194 = vunpack.c.l.b16 %v116
  %v195 = vunpack.c.h.b16 %v116
  %v196 = vunpack.c.l.b16 %v117
  %v197 = vunpack.c.h.b16 %v117
  %v198 = vunpack.c.l.b16 %v118
  %v199 = vunpack.c.h.b16 %v118
  %v200 = vunpack.c.l.b16 %v119
  %v201 = vunpack.c.h.b16 %v119
  %v202 = vunpack.c.l.b16 %v120
  %v203 = vunpack.c.h.b16 %v120
  %v204 = vunpack.c.l.b16 %v121
  %v205 = vunpack.c.h.b16 %v121
  %v206 = vunpack.c.l.b16 %v122
  %v207 = vunpack.c.h.b16 %v122
  %v208 = vunpack.c.l.b16 %v123
  %v209 = vunpack.c.h.b16 %v123
  %v210 = vunpack.c.l.b16 %v124
  %v211 = vunpack.c.h.b16 %v124
  %v212 = vunpack.c.l.b16 %v125
  %v213 = vunpack.c.h.b16 %v125
  %v214 = vunpack.c.l.b16 %v126
  %v215 = vunpack.c.h.b16 %v126
  %v216 = vunpack.c.l.b16 %v127
  %v217 = vunpack.c.h.b16 %v127
  %v218 = vunpack.c.l.b16 %v128
  %v219 = vunpack.c.h.b16 %v128
  %v220 = vunpack.c.l.b16 %v129
  %v221 = vunpack.c.h.b16 %v129
  %v222 = vunpack.c.l.b16 %v130
  %v223 = vunpack.c.h.b16 %v130
  %v224 = vunpack.c.l.b16 %v131
  %v225 = vunpack.c.h.b16 %v131
  %v226 = vunpack.c.l.b16 %v132
  %v227 = vunpack.c.h.b16 %v132
  %v228 = vunpack.c.l.b16 %v133
  %v229 = vunpack.c.h.b16 %v133
  %v230 = vunpack.c.l.b16 %v134
  %v231 = vunpack.c.h.b16 %v134
  %v232 = vunpack.c.l.b16 %v135
  %v233 = vunpack.c.h.b16 %v135
  %v234 = vunpack.c.l.b16 %v136
  %v235 = vunpack.c.h.b16 %v136
  %v236 = vunpack.c.l.b16 %v137
  %v237 = vunpack.c.h.b16 %v137
  %v238 = vunpack.c.l.b16 %v138
  %v239 = vunpack.c.h.b16 %v138
  %v240 = vunpack.c.l.b16 %v139
  %v241 = vunpack.c.h.b16 %v139
  %v242 = vpack.c.b16 %v180, %v178
  %v243 = vpack.c.b16 %v181, %v179
  %v244 = vpack.c.b16 %v184, %v182
  %v245 = vpack.c.b16 %v185, %v183
  %v246 = vpack.c.b16 %v188, %v186
  %v247 = vpack.c.b16 %v189, %v187
  %v248 = vpack.c.b16 %v192, %v190
  %v249 = vpack.c.b16 %v193, %v191
  %v250 = vpack.c.b16 %v196, %v194
  %v251 = vpack.c.b16 %v197, %v195
  %v252 = vpack.c.b16 %v200, %v198
  %v253 = vpack.c.b16 %v201, %v199
  %v254 = vpack.c.b16 %v204, %v202
  %v255 = vpack.c.b16 %v205, %v203
  %v256 = vpack.c.b16 %v208, %v206
  %v257 = vpack.c.b16 %v209, %v207
  %v258 = vpack.c.b16 %v212, %v210
  %v259 = vpack.c.b16 %v213, %v211
  %v260 = vpack.c.b16 %v216, %v214
  %v261 = vpack.c.b16 %v217, %v215
  %v262 = vpack.c.b16 %v220, %v218
  %v263 = vpack.c.b16 %v221, %v219
  %v264 = vpack.c.b16 %v224, %v222
  %v265 = vpack.c.b16 %v225, %v223
  %v266 = vpack.c.b16 %v228, %v226
  %v267 = vpack.c.b16 %v229, %v227
  %v268 = vpack.c.b16 %v232, %v230
  %v269 = vpack.c.b16 %v233, %v231
  %v270 = vpack.c.b16 %v236, %v234
  %v271 = vpack.c.b16 %v237, %v235
  %v272 = vpack.c.b16 %v240, %v238
  %v273 = vpack.c.b16 %v241, %v239
  %306 = vmatpush.bf16.msra.mxu0 %v256
  %307 = vmatpush.bf16.msra.mxu0 %v254
  %308 = vmatpush.bf16.msra.mxu0 %v252
  %309 = vmatpush.bf16.msra.mxu0 %v250
  %310 = vmatpush.bf16.msra.mxu0 %v248
  %311 = vmatpush.bf16.msra.mxu0 %v246
  %312 = vmatpush.bf16.msra.mxu0 %v244
  %313 = vmatpush.bf16.msra.mxu0 %v242
  %314 = vmatmul.bf16.gmra.mxu0 %v106
  %v315 = vpop.f32.mrf.mxu0
  %v316 = vadd.f32 %v142, %v315
  %v317 = vpop.f32.mrf.mxu0
  %v318 = vadd.f32 %v142, %v317
  %319 = vdwg.mxu0
  %320 = vmatpush.bf16.msra.mxu0 %v272
  %321 = vmatpush.bf16.msra.mxu0 %v270
  %322 = vmatpush.bf16.msra.mxu0 %v268
  %323 = vmatpush.bf16.msra.mxu0 %v266
  %324 = vmatpush.bf16.msra.mxu0 %v264
  %325 = vmatpush.bf16.msra.mxu0 %v262
  %326 = vmatpush.bf16.msra.mxu0 %v260
  %327 = vmatpush.bf16.msra.mxu0 %v258
  %328 = vmatmul.bf16.gmra.mxu0 %v107
  %v329 = vpop.f32.mrf.mxu0
  %v330 = vadd.f32 %v316, %v329
  %v331 = vpop.f32.mrf.mxu0
  %v332 = vadd.f32 %v318, %v331
  %333 = vdwg.mxu0
  %334 = vmatpush.bf16.msra.mxu0 %v257
  %335 = vmatpush.bf16.msra.mxu0 %v255
  %336 = vmatpush.bf16.msra.mxu0 %v253
  %337 = vmatpush.bf16.msra.mxu0 %v251
  %338 = vmatpush.bf16.msra.mxu0 %v249
  %339 = vmatpush.bf16.msra.mxu0 %v247
  %340 = vmatpush.bf16.msra.mxu0 %v245
  %341 = vmatpush.bf16.msra.mxu0 %v243
  %342 = vmatmul.bf16.gmra.mxu0 %v106
  %v343 = vpop.f32.mrf.mxu0
  %v344 = vadd.f32 %v143, %v343
  %v345 = vpop.f32.mrf.mxu0
  %v346 = vadd.f32 %v143, %v345
  %347 = vdwg.mxu0
  %348 = vmatpush.bf16.msra.mxu0 %v273
  %349 = vmatpush.bf16.msra.mxu0 %v271
  %350 = vmatpush.bf16.msra.mxu0 %v269
  %351 = vmatpush.bf16.msra.mxu0 %v267
  %352 = vmatpush.bf16.msra.mxu0 %v265
  %353 = vmatpush.bf16.msra.mxu0 %v263
  %354 = vmatpush.bf16.msra.mxu0 %v261
  %355 = vmatpush.bf16.msra.mxu0 %v259
  %356 = vmatmul.bf16.gmra.mxu0 %v107
  %v357 = vpop.f32.mrf.mxu0
  %v358 = vadd.f32 %v344, %v357
  %v359 = vpop.f32.mrf.mxu0
  %v360 = vadd.f32 %v346, %v359
  %361 = vdwg.mxu0
  %v362 = vmax.f32 %v330, 0.0
  %v363 = vmax.f32 %v358, 0.0
  %v364 = vmax.f32 %v332, 0.0
  %v365 = vmax.f32 %v360, 0.0
  %v366 = vpack.c.bf16 %v364, %v362
  %v367 = vpack.c.bf16 %v365, %v363
  %v368 = vld [vmem:[%s5] sm:$0xff]
  %v369 = vld [vmem:[%s5 + $0x8] sm:$0xff]
  %v370 = vld [vmem:[%s5 + $0x10] sm:$0xff]
  %v371 = vld [vmem:[%s5 + $0x18] sm:$0xff]
  %v372 = vld [vmem:[%s5 + $0x20] sm:$0xff]
  %v373 = vld [vmem:[%s5 + $0x28] sm:$0xff]
  %v374 = vld [vmem:[%s5 + $0x30] sm:$0xff]
  %v375 = vld [vmem:[%s5 + $0x38] sm:$0xff]
  %v376 = vld [vmem:[%s5 + $0x40] sm:$0xff]
  %v377 = vld [vmem:[%s5 + $0x48] sm:$0xff]
  %v378 = vld [vmem:[%s5 + $0x50] sm:$0xff]
  %v379 = vld [vmem:[%s5 + $0x58] sm:$0xff]
  %v380 = vld [vmem:[%s5 + $0x60] sm:$0xff]
  %v381 = vld [vmem:[%s5 + $0x68] sm:$0xff]
  %v382 = vld [vmem:[%s5 + $0x70] sm:$0xff]
  %v383 = vld [vmem:[%s5 + $0x78] sm:$0xff]
  %v384 = vld [vmem:[%s5 + $0x80] sm:$0xff]
  %v385 = vld [vmem:[%s5 + $0x88] sm:$0xff]
  %v386 = vld [vmem:[%s5 + $0x90] sm:$0xff]
  %v387 = vld [vmem:[%s5 + $0x98] sm:$0xff]
  %v388 = vld [vmem:[%s5 + $0xa0] sm:$0xff]
  %v389 = vld [vmem:[%s5 + $0xa8] sm:$0xff]
  %v390 = vld [vmem:[%s5 + $0xb0] sm:$0xff]
  %v391 = vld [vmem:[%s5 + $0xb8] sm:$0xff]
  %v392 = vld [vmem:[%s5 + $0xc0] sm:$0xff]
  %v393 = vld [vmem:[%s5 + $0xc8] sm:$0xff]
  %v394 = vld [vmem:[%s5 + $0xd0] sm:$0xff]
  %v395 = vld [vmem:[%s5 + $0xd8] sm:$0xff]
  %v396 = vld [vmem:[%s5 + $0xe0] sm:$0xff]
  %v397 = vld [vmem:[%s5 + $0xe8] sm:$0xff]
  %v398 = vld [vmem:[%s5 + $0xf0] sm:$0xff]
  %v399 = vld [vmem:[%s5 + $0xf8] sm:$0xff]
  %v400 = vld [vmem:[%s6] sm:$0x3]
  %v402 = vperm.slane %v400, 0
  %v403 = vperm.slane %v400, 1
  %v438 = vunpack.c.l.b16 %v368
  %v439 = vunpack.c.h.b16 %v368
  %v440 = vunpack.c.l.b16 %v369
  %v441 = vunpack.c.h.b16 %v369
  %v442 = vunpack.c.l.b16 %v370
  %v443 = vunpack.c.h.b16 %v370
  %v444 = vunpack.c.l.b16 %v371
  %v445 = vunpack.c.h.b16 %v371
  %v446 = vunpack.c.l.b16 %v372
  %v447 = vunpack.c.h.b16 %v372
  %v448 = vunpack.c.l.b16 %v373
  %v449 = vunpack.c.h.b16 %v373
  %v450 = vunpack.c.l.b16 %v374
  %v451 = vunpack.c.h.b16 %v374
  %v452 = vunpack.c.l.b16 %v375
  %v453 = vunpack.c.h.b16 %v375
  %v454 = vunpack.c.l.b16 %v376
  %v455 = vunpack.c.h.b16 %v376
  %v456 = vunpack.c.l.b16 %v377
  %v457 = vunpack.c.h.b16 %v377
  %v458 = vunpack.c.l.b16 %v378
  %v459 = vunpack.c.h.b16 %v378
  %v460 = vunpack.c.l.b16 %v379
  %v461 = vunpack.c.h.b16 %v379
  %v462 = vunpack.c.l.b16 %v380
  %v463 = vunpack.c.h.b16 %v380
  %v464 = vunpack.c.l.b16 %v381
  %v465 = vunpack.c.h.b16 %v381
  %v466 = vunpack.c.l.b16 %v382
  %v467 = vunpack.c.h.b16 %v382
  %v468 = vunpack.c.l.b16 %v383
  %v469 = vunpack.c.h.b16 %v383
  %v470 = vunpack.c.l.b16 %v384
  %v471 = vunpack.c.h.b16 %v384
  %v472 = vunpack.c.l.b16 %v385
  %v473 = vunpack.c.h.b16 %v385
  %v474 = vunpack.c.l.b16 %v386
  %v475 = vunpack.c.h.b16 %v386
  %v476 = vunpack.c.l.b16 %v387
  %v477 = vunpack.c.h.b16 %v387
  %v478 = vunpack.c.l.b16 %v388
  %v479 = vunpack.c.h.b16 %v388
  %v480 = vunpack.c.l.b16 %v389
  %v481 = vunpack.c.h.b16 %v389
  %v482 = vunpack.c.l.b16 %v390
  %v483 = vunpack.c.h.b16 %v390
  %v484 = vunpack.c.l.b16 %v391
  %v485 = vunpack.c.h.b16 %v391
  %v486 = vunpack.c.l.b16 %v392
  %v487 = vunpack.c.h.b16 %v392
  %v488 = vunpack.c.l.b16 %v393
  %v489 = vunpack.c.h.b16 %v393
  %v490 = vunpack.c.l.b16 %v394
  %v491 = vunpack.c.h.b16 %v394
  %v492 = vunpack.c.l.b16 %v395
  %v493 = vunpack.c.h.b16 %v395
  %v494 = vunpack.c.l.b16 %v396
  %v495 = vunpack.c.h.b16 %v396
  %v496 = vunpack.c.l.b16 %v397
  %v497 = vunpack.c.h.b16 %v397
  %v498 = vunpack.c.l.b16 %v398
  %v499 = vunpack.c.h.b16 %v398
  %v500 = vunpack.c.l.b16 %v399
  %v501 = vunpack.c.h.b16 %v399
  %v502 = vpack.c.b16 %v440, %v438
  %v503 = vpack.c.b16 %v441, %v439
  %v504 = vpack.c.b16 %v444, %v442
  %v505 = vpack.c.b16 %v445, %v443
  %v506 = vpack.c.b16 %v448, %v446
  %v507 = vpack.c.b16 %v449, %v447
  %v508 = vpack.c.b16 %v452, %v450
  %v509 = vpack.c.b16 %v453, %v451
  %v510 = vpack.c.b16 %v456, %v454
  %v511 = vpack.c.b16 %v457, %v455
  %v512 = vpack.c.b16 %v460, %v458
  %v513 = vpack.c.b16 %v461, %v459
  %v514 = vpack.c.b16 %v464, %v462
  %v515 = vpack.c.b16 %v465, %v463
  %v516 = vpack.c.b16 %v468, %v466
  %v517 = vpack.c.b16 %v469, %v467
  %v518 = vpack.c.b16 %v472, %v470
  %v519 = vpack.c.b16 %v473, %v471
  %v520 = vpack.c.b16 %v476, %v474
  %v521 = vpack.c.b16 %v477, %v475
  %v522 = vpack.c.b16 %v480, %v478
  %v523 = vpack.c.b16 %v481, %v479
  %v524 = vpack.c.b16 %v484, %v482
  %v525 = vpack.c.b16 %v485, %v483
  %v526 = vpack.c.b16 %v488, %v486
  %v527 = vpack.c.b16 %v489, %v487
  %v528 = vpack.c.b16 %v492, %v490
  %v529 = vpack.c.b16 %v493, %v491
  %v530 = vpack.c.b16 %v496, %v494
  %v531 = vpack.c.b16 %v497, %v495
  %v532 = vpack.c.b16 %v500, %v498
  %v533 = vpack.c.b16 %v501, %v499
  %566 = vmatpush.bf16.msra.mxu0 %v516
  %567 = vmatpush.bf16.msra.mxu0 %v514
  %568 = vmatpush.bf16.msra.mxu0 %v512
  %569 = vmatpush.bf16.msra.mxu0 %v510
  %570 = vmatpush.bf16.msra.mxu0 %v508
  %571 = vmatpush.bf16.msra.mxu0 %v506
  %572 = vmatpush.bf16.msra.mxu0 %v504
  %573 = vmatpush.bf16.msra.mxu0 %v502
  %574 = vmatmul.bf16.gmra.mxu0 %v366
  %v575 = vpop.f32.mrf.mxu0
  %v576 = vadd.f32 %v402, %v575
  %v577 = vpop.f32.mrf.mxu0
  %v578 = vadd.f32 %v402, %v577
  %579 = vdwg.mxu0
  %580 = vmatpush.bf16.msra.mxu0 %v532
  %581 = vmatpush.bf16.msra.mxu0 %v530
  %582 = vmatpush.bf16.msra.mxu0 %v528
  %583 = vmatpush.bf16.msra.mxu0 %v526
  %584 = vmatpush.bf16.msra.mxu0 %v524
  %585 = vmatpush.bf16.msra.mxu0 %v522
  %586 = vmatpush.bf16.msra.mxu0 %v520
  %587 = vmatpush.bf16.msra.mxu0 %v518
  %588 = vmatmul.bf16.gmra.mxu0 %v367
  %v589 = vpop.f32.mrf.mxu0
  %v590 = vadd.f32 %v576, %v589
  %v591 = vpop.f32.mrf.mxu0
  %v592 = vadd.f32 %v578, %v591
  %593 = vdwg.mxu0
  %594 = vmatpush.bf16.msra.mxu0 %v517
  %595 = vmatpush.bf16.msra.mxu0 %v515
  %596 = vmatpush.bf16.msra.mxu0 %v513
  %597 = vmatpush.bf16.msra.mxu0 %v511
  %598 = vmatpush.bf16.msra.mxu0 %v509
  %599 = vmatpush.bf16.msra.mxu0 %v507
  %600 = vmatpush.bf16.msra.mxu0 %v505
  %601 = vmatpush.bf16.msra.mxu0 %v503
  %602 = vmatmul.bf16.gmra.mxu0 %v366
  %v603 = vpop.f32.mrf.mxu0
  %v604 = vadd.f32 %v403, %v603
  %v605 = vpop.f32.mrf.mxu0
  %v606 = vadd.f32 %v403, %v605
  %607 = vdwg.mxu0
  %608 = vmatpush.bf16.msra.mxu0 %v533
  %609 = vmatpush.bf16.msra.mxu0 %v531
  %610 = vmatpush.bf16.msra.mxu0 %v529
  %611 = vmatpush.bf16.msra.mxu0 %v527
  %612 = vmatpush.bf16.msra.mxu0 %v525
  %613 = vmatpush.bf16.msra.mxu0 %v523
  %614 = vmatpush.bf16.msra.mxu0 %v521
  %615 = vmatpush.bf16.msra.mxu0 %v519
  %616 = vmatmul.bf16.gmra.mxu0 %v367
  %v617 = vpop.f32.mrf.mxu0
  %v618 = vadd.f32 %v604, %v617
  %v619 = vpop.f32.mrf.mxu0
  %v620 = vadd.f32 %v606, %v619
  %621 = vdwg.mxu0
  %v622 = vmax.f32 %v590, 0.0
  %v623 = vmax.f32 %v618, 0.0
  %v624 = vmax.f32 %v592, 0.0
  %v625 = vmax.f32 %v620, 0.0
  %v626 = vpack.c.bf16 %v624, %v622
  %v627 = vpack.c.bf16 %v625, %v623
  %v628 = vld [vmem:[%s7] sm:$0xf]
  %v629 = vld [vmem:[%s7 + $0x4] sm:$0xf]
  %v630 = vld [vmem:[%s7 + $0x8] sm:$0xf]
  %v631 = vld [vmem:[%s7 + $0xc] sm:$0xf]
  %v632 = vld [vmem:[%s7 + $0x10] sm:$0xf]
  %v633 = vld [vmem:[%s7 + $0x14] sm:$0xf]
  %v634 = vld [vmem:[%s7 + $0x18] sm:$0xf]
  %v635 = vld [vmem:[%s7 + $0x1c] sm:$0xf]
  %v636 = vld [vmem:[%s7 + $0x20] sm:$0xf]
  %v637 = vld [vmem:[%s7 + $0x24] sm:$0xf]
  %v638 = vld [vmem:[%s7 + $0x28] sm:$0xf]
  %v639 = vld [vmem:[%s7 + $0x2c] sm:$0xf]
  %v640 = vld [vmem:[%s7 + $0x30] sm:$0xf]
  %v641 = vld [vmem:[%s7 + $0x34] sm:$0xf]
  %v642 = vld [vmem:[%s7 + $0x38] sm:$0xf]
  %v643 = vld [vmem:[%s7 + $0x3c] sm:$0xf]
  %v644 = vld [vmem:[%s7 + $0x40] sm:$0xf]
  %v645 = vld [vmem:[%s7 + $0x44] sm:$0xf]
  %v646 = vld [vmem:[%s7 + $0x48] sm:$0xf]
  %v647 = vld [vmem:[%s7 + $0x4c] sm:$0xf]
  %v648 = vld [vmem:[%s7 + $0x50] sm:$0xf]
  %v649 = vld [vmem:[%s7 + $0x54] sm:$0xf]
  %v650 = vld [vmem:[%s7 + $0x58] sm:$0xf]
  %v651 = vld [vmem:[%s7 + $0x5c] sm:$0xf]
  %v652 = vld [vmem:[%s7 + $0x60] sm:$0xf]
  %v653 = vld [vmem:[%s7 + $0x64] sm:$0xf]
  %v654 = vld [vmem:[%s7 + $0x68] sm:$0xf]
  %v655 = vld [vmem:[%s7 + $0x6c] sm:$0xf]
  %v656 = vld [vmem:[%s7 + $0x70] sm:$0xf]
  %v657 = vld [vmem:[%s7 + $0x74] sm:$0xf]
  %v658 = vld [vmem:[%s7 + $0x78] sm:$0xf]
  %v659 = vld [vmem:[%s7 + $0x7c] sm:$0xf]
  %v660 = vld [vmem:[%s8] sm:$0x1]
  %v662 = vperm.slane %v660, 0
  %v696 = vunpack.c.l.b16 %v628
  %v697 = vunpack.c.l.b16 %v629
  %v698 = vunpack.c.l.b16 %v630
  %v699 = vunpack.c.l.b16 %v631
  %v700 = vunpack.c.l.b16 %v632
  %v701 = vunpack.c.l.b16 %v633
  %v702 = vunpack.c.l.b16 %v634
  %v703 = vunpack.c.l.b16 %v635
  %v704 = vunpack.c.l.b16 %v636
  %v705 = vunpack.c.l.b16 %v637
  %v706 = vunpack.c.l.b16 %v638
  %v707 = vunpack.c.l.b16 %v639
  %v708 = vunpack.c.l.b16 %v640
  %v709 = vunpack.c.l.b16 %v641
  %v710 = vunpack.c.l.b16 %v642
  %v711 = vunpack.c.l.b16 %v643
  %v712 = vunpack.c.l.b16 %v644
  %v713 = vunpack.c.l.b16 %v645
  %v714 = vunpack.c.l.b16 %v646
  %v715 = vunpack.c.l.b16 %v647
  %v716 = vunpack.c.l.b16 %v648
  %v717 = vunpack.c.l.b16 %v649
  %v718 = vunpack.c.l.b16 %v650
  %v719 = vunpack.c.l.b16 %v651
  %v720 = vunpack.c.l.b16 %v652
  %v721 = vunpack.c.l.b16 %v653
  %v722 = vunpack.c.l.b16 %v654
  %v723 = vunpack.c.l.b16 %v655
  %v724 = vunpack.c.l.b16 %v656
  %v725 = vunpack.c.l.b16 %v657
  %v726 = vunpack.c.l.b16 %v658
  %v727 = vunpack.c.l.b16 %v659
  %v728 = vpack.c.b16 %v697, %v696
  %v729 = vpack.c.b16 %v699, %v698
  %v730 = vpack.c.b16 %v701, %v700
  %v731 = vpack.c.b16 %v703, %v702
  %v732 = vpack.c.b16 %v705, %v704
  %v733 = vpack.c.b16 %v707, %v706
  %v734 = vpack.c.b16 %v709, %v708
  %v735 = vpack.c.b16 %v711, %v710
  %v736 = vpack.c.b16 %v713, %v712
  %v737 = vpack.c.b16 %v715, %v714
  %v738 = vpack.c.b16 %v717, %v716
  %v739 = vpack.c.b16 %v719, %v718
  %v740 = vpack.c.b16 %v721, %v720
  %v741 = vpack.c.b16 %v723, %v722
  %v742 = vpack.c.b16 %v725, %v724
  %v743 = vpack.c.b16 %v727, %v726
  %760 = vmatpush.bf16.msra.mxu0 %v735
  %761 = vmatpush.bf16.msra.mxu0 %v734
  %762 = vmatpush.bf16.msra.mxu0 %v733
  %763 = vmatpush.bf16.msra.mxu0 %v732
  %764 = vmatpush.bf16.msra.mxu0 %v731
  %765 = vmatpush.bf16.msra.mxu0 %v730
  %766 = vmatpush.bf16.msra.mxu0 %v729
  %767 = vmatpush.bf16.msra.mxu0 %v728
  %768 = vmatmul.bf16.gmra.mxu0 %v626
  %v769 = vpop.f32.mrf.mxu0
  %v770 = vadd.f32 %v662, %v769
  %v771 = vpop.f32.mrf.mxu0
  %v772 = vadd.f32 %v662, %v771
  %773 = vdwg.mxu0
  %774 = vmatpush.bf16.msra.mxu0 %v743
  %775 = vmatpush.bf16.msra.mxu0 %v742
  %776 = vmatpush.bf16.msra.mxu0 %v741
  %777 = vmatpush.bf16.msra.mxu0 %v740
  %778 = vmatpush.bf16.msra.mxu0 %v739
  %779 = vmatpush.bf16.msra.mxu0 %v738
  %780 = vmatpush.bf16.msra.mxu0 %v737
  %781 = vmatpush.bf16.msra.mxu0 %v736
  %782 = vmatmul.bf16.gmra.mxu0 %v627
  %v783 = vpop.f32.mrf.mxu0
  %v784 = vadd.f32 %v770, %v783
  %v785 = vpop.f32.mrf.mxu0
  %v786 = vadd.f32 %v772, %v785
  %787 = vdwg.mxu0
  %788 = vst [vmem:[%s9] sm:$0xff] %v784
  %789 = vst [vmem:[%s9 + $0x8] sm:$0xff] %v786
  // Predicated region
  $region38: #{network_forward.1} parent=0 // pred_check
    _
  $region39: #{network_forward.1} parent=0 // pred_check_branch
    %791 = sbr.rel (0) target = $region41
  $region40: #{network_forward.1} parent=0 // pred_region
    _
  $region41: #{network_forward.1} parent=0 // pred_fallthru
    _
  // Predicated region
  $region42: #{network_forward.1} parent=0 // pred_check
    _
  $region43: #{network_forward.1} parent=0 // pred_check_branch
    %793 = sbr.rel (0) target = $region45
  $region44: #{network_forward.1} parent=0 // pred_region
    _
  $region45: #{network_forward.1} parent=0 // pred_fallthru
    _

</llo_original>
